<compile_context>
chip_gen: v6e
topology: v6e:2x2x1
jax: 0.10.0
libtpu: 0.0.40
codegen_flags: <defaults>
</compile_context>

<pallas_src>
import functools
import numpy as np

import jax
import jax.numpy as jnp
from jax.experimental import pallas as pl
from jax.experimental.pallas import tpu as pltpu

LANES = 128
TILE_R = 2048  # 2048 x 128 f32 = 1 MiB per buffer; 4 MiB double-buffered in/out.


def _alpha_drop_kernel(seed_ref, x_ref, o_ref, *, threshold, a, b, drop_val):
    block_rows, lanes = x_ref.shape

    seed_u = seed_ref[0].astype(jnp.uint32)
    row_base = (pl.program_id(0) * block_rows).astype(jnp.uint32)

    # Global element counter for this tile.
    row = jax.lax.broadcasted_iota(jnp.uint32, (block_rows, lanes), 0) + row_base
    lane = jax.lax.broadcasted_iota(jnp.uint32, (block_rows, lanes), 1)
    ctr = row * jnp.uint32(lanes) + lane

    # Counter-based hash (lowbias32 finalizer) seeded by the scalar seed.
    z = ctr * jnp.uint32(0x9E3779B1) + (seed_u * jnp.uint32(0x85EBCA77) + jnp.uint32(1))
    z = z ^ (z >> jnp.uint32(16))
    z = z * jnp.uint32(0x7FEB352D)
    z = z ^ (z >> jnp.uint32(15))
    z = z * jnp.uint32(0x846CA68B)
    z = z ^ (z >> jnp.uint32(16))

    keep = z < jnp.uint32(threshold)  # P(keep) = keep_prob

    x = x_ref[...].astype(jnp.float32)
    kept = x * jnp.float32(a) + jnp.float32(b)
    o_ref[...] = jnp.where(keep, kept, jnp.float32(drop_val)).astype(o_ref.dtype)


def alpha_drop(x, seed, *, p=0.05, alpha=-1.7580993408473766,
               fixedPointMean=0.0, fixedPointVar=1.0, training=True,
               tile_rows=TILE_R):
    keep_prob = 1.0 - p
    if keep_prob == 1.0 or not training:
        return x

    a = float(np.sqrt(fixedPointVar /
                      (keep_prob * ((1 - keep_prob) * (alpha - fixedPointMean) ** 2
                                    + fixedPointVar))))
    b = float(fixedPointMean - a * (keep_prob * fixedPointMean
                                    + (1 - keep_prob) * alpha))
    drop_val = a * alpha + b
    threshold = min(int(round(keep_prob * float(2 ** 32))), 2 ** 32 - 1)

    orig_shape = x.shape
    orig_dtype = x.dtype
    flat = x.reshape(-1)
    n = flat.shape[0]
    rows = -(-n // LANES)

    # Fast path: lane-dense reshape, no padding copy (common NCHW conv case).
    if n % LANES == 0 and (rows % 8 == 0 or rows <= tile_rows):
        slab = flat.reshape(rows, LANES)
        padded = False
    else:
        rows = -(-rows // 8) * 8
        slab = jnp.pad(flat, (0, rows * LANES - n)).reshape(rows, LANES)
        padded = True

    block_rows = min(tile_rows, rows)
    grid = (pl.cdiv(rows, block_rows),)

    seed_arr = jnp.array([seed], dtype=jnp.int32)

    kernel = functools.partial(_alpha_drop_kernel,
                               threshold=threshold, a=a, b=b, drop_val=drop_val)

    out = pl.pallas_call(
        kernel,
        out_shape=jax.ShapeDtypeStruct((rows, LANES), orig_dtype),
        grid_spec=pltpu.PrefetchScalarGridSpec(
            num_scalar_prefetch=1,
            grid=grid,
            in_specs=[pl.BlockSpec((block_rows, LANES), lambda i, seed: (i, 0))],
            out_specs=pl.BlockSpec((block_rows, LANES), lambda i, seed: (i, 0)),
        ),
        compiler_params=pltpu.CompilerParams(
            dimension_semantics=("parallel",)),
    )(seed_arr, slab)

    if padded:
        return out.reshape(-1)[:n].reshape(orig_shape)
    return out.reshape(orig_shape)


if __name__ == "__main__":
    key = jax.random.PRNGKey(0)
    # NCHW activation, consistent with the source module's usage.
    x = jax.random.normal(key, (2, 4, 16, 16), dtype=jnp.float32)

    y = alpha_drop(x, seed=0, p=0.05, training=True)
    y = jax.block_until_ready(y)

    # Sanity: shape/dtype preserved; every output is either the kept branch
    # (a*x + b) or the dropped constant (a*alpha + b); drop rate ~ p.
    assert y.shape == x.shape and y.dtype == x.dtype
    p = 0.05
    alpha = -1.7580993408473766
    keep_prob = 1.0 - p
    a = np.sqrt(1.0 / (keep_prob * ((1 - keep_prob) * alpha ** 2 + 1.0)))
    b = -a * (1 - keep_prob) * alpha
    kept_val = a * np.asarray(x) + b
    drop_val = a * alpha + b
    yn = np.asarray(y)
    is_kept = np.isclose(yn, kept_val, atol=1e-5)
    is_drop = np.isclose(yn, drop_val, atol=1e-5)
    assert np.all(is_kept | is_drop)
    drop_frac = 1.0 - is_kept.mean()
    assert drop_frac < 0.25  # ~p=0.05 with small-sample slack

    # Eval mode: identity.
    y_eval = jax.block_until_ready(alpha_drop(x, seed=0, training=False))
    assert np.allclose(np.asarray(y_eval), np.asarray(x))

    print("KERNEL_OK")
</pallas_src>

<mosaic_0001>
module attributes {stable_mosaic.version = 11 : i64} {
  func.func @_alpha_drop_kernel(%arg0: i32, %arg1: memref<1xi32, #tpu.memory_space<smem>>, %arg2: memref<16x128xf32, #tpu.memory_space<vmem>>, %arg3: memref<16x128xf32, #tpu.memory_space<vmem>>) attributes {dimension_semantics = [#tpu.dimension_semantics<parallel>], iteration_bounds = array<i64: 1>, scalar_prefetch = 1 : i64, scratch_operands = 0 : i64, tpu.core_type = #tpu.core_type<tc>, window_params = [{transform_indices = @transform_0, window_bounds = array<i64: 16, 128>}, {transform_indices = @transform_1, window_bounds = array<i64: 16, 128>}]} {
    %c0 = arith.constant 0 : index
    %0 = memref.load %arg1[%c0] : memref<1xi32, #tpu.memory_space<smem>>
    %c16_i32 = arith.constant 16 : i32
    %1 = arith.muli %arg0, %c16_i32 : i32
    %2 = tpu.iota {dimensions = array<i32: 0>} : vector<16x128xi32>
    %3 = vector.broadcast %1 : i32 to vector<16x128xi32>
    %4 = arith.addi %2, %3 : vector<16x128xi32>
    %5 = tpu.iota {dimensions = array<i32: 1>} : vector<16x128xi32>
    %c128_i32 = arith.constant 128 : i32
    %6 = vector.broadcast %c128_i32 : i32 to vector<16x128xi32>
    %7 = arith.muli %4, %6 : vector<16x128xi32>
    %8 = arith.addi %7, %5 : vector<16x128xi32>
    %c-1640531535_i32 = arith.constant -1640531535 : i32
    %9 = vector.broadcast %c-1640531535_i32 : i32 to vector<16x128xi32>
    %10 = arith.muli %8, %9 : vector<16x128xi32>
    %c-2048144777_i32 = arith.constant -2048144777 : i32
    %11 = arith.muli %0, %c-2048144777_i32 : i32
    %c1_i32 = arith.constant 1 : i32
    %12 = arith.addi %11, %c1_i32 : i32
    %13 = vector.broadcast %12 : i32 to vector<16x128xi32>
    %14 = arith.addi %10, %13 : vector<16x128xi32>
    %c16_i32_0 = arith.constant 16 : i32
    %15 = vector.broadcast %c16_i32_0 : i32 to vector<16x128xi32>
    %16 = arith.shrui %14, %15 : vector<16x128xi32>
    %17 = arith.xori %14, %16 : vector<16x128xi32>
    %c2146121005_i32 = arith.constant 2146121005 : i32
    %18 = vector.broadcast %c2146121005_i32 : i32 to vector<16x128xi32>
    %19 = arith.muli %17, %18 : vector<16x128xi32>
    %c15_i32 = arith.constant 15 : i32
    %20 = vector.broadcast %c15_i32 : i32 to vector<16x128xi32>
    %21 = arith.shrui %19, %20 : vector<16x128xi32>
    %22 = arith.xori %19, %21 : vector<16x128xi32>
    %c-2073254261_i32 = arith.constant -2073254261 : i32
    %23 = vector.broadcast %c-2073254261_i32 : i32 to vector<16x128xi32>
    %24 = arith.muli %22, %23 : vector<16x128xi32>
    %c16_i32_1 = arith.constant 16 : i32
    %25 = vector.broadcast %c16_i32_1 : i32 to vector<16x128xi32>
    %26 = arith.shrui %24, %25 : vector<16x128xi32>
    %27 = arith.xori %24, %26 : vector<16x128xi32>
    %c-214748365_i32 = arith.constant -214748365 : i32
    %28 = vector.broadcast %c-214748365_i32 : i32 to vector<16x128xi32>
    %29 = arith.cmpi ult, %27, %28 : vector<16x128xi32>
    %c0_2 = arith.constant 0 : index
    %c0_3 = arith.constant 0 : index
    %30 = vector.load %arg2[%c0_2, %c0_3] : memref<16x128xf32, #tpu.memory_space<vmem>>, vector<16x128xf32>
    %cst = arith.constant 0.954844474 : f32
    %31 = vector.broadcast %cst : f32 to vector<16x128xf32>
    %32 = arith.mulf %30, %31 : vector<16x128xf32>
    %cst_4 = arith.constant 0.0839355737 : f32
    %33 = vector.broadcast %cst_4 : f32 to vector<16x128xf32>
    %34 = arith.addf %32, %33 : vector<16x128xf32>
    %cst_5 = arith.constant -1.59477592 : f32
    %35 = vector.broadcast %cst_5 : f32 to vector<16x128xf32>
    %36 = arith.select %29, %34, %35 : vector<16x128xi1>, vector<16x128xf32>
    %c0_6 = arith.constant 0 : index
    %c0_7 = arith.constant 0 : index
    %37 = vector.load %arg3[%c0_6, %c0_7] : memref<16x128xf32, #tpu.memory_space<vmem>>, vector<16x128xf32>
    tpu.vector_store %arg3[%c0_6, %c0_7], %36 {strides = array<i32>} : memref<16x128xf32, #tpu.memory_space<vmem>>, vector<16x128xf32>,
    return
  }
  func.func @transform_0(%arg0: i32, %arg1: memref<1xi32, #tpu.memory_space<smem>>) -> (i32, i32) {
    %c0_i32 = arith.constant 0 : i32
    %c0_i32_0 = arith.constant 0 : i32
    return %arg0, %c0_i32 : i32, i32
  }
  func.func @transform_1(%arg0: i32, %arg1: memref<1xi32, #tpu.memory_space<smem>>) -> (i32, i32) {
    %c0_i32 = arith.constant 0 : i32
    %c0_i32_0 = arith.constant 0 : i32
    return %arg0, %c0_i32 : i32, i32
  }
}

</mosaic_0001>

<llo_original>
// kernel: tpu_custom_call.1
$region0: #{tpu_custom_call.1}
  #allocation0 [shape = 'u32[]', space=smem, size = 0x4, offset = 0x4, fixed_abs, tag = 'smem constant byte address 0x4 - core index']
  #allocation1 [shape = 'u32[144,128]{1,0:T(1,128)}', space=vmem, size = 0x12000, scoped, tag = 'internal scratch']
  #allocation2 [shape = 's32[1]{0}', space=sflag, size = 0x4, scoped, tag = 'scoped memory for tpu_custom_call.1']
  #allocation3 [shape = 's32[1]{0:T(128)S(6)}', space=smem, size = 0x200, scoped, tag = 'prefetched SMEM operand 0']
  %s0 = inlined_call_operand.<no memory space> [shape: s32[1], index: 0, kind: input, shape index: {}]
  %s1 = inlined_call_operand.hbm [shape: f32[16,128], index: 1, kind: input, shape index: {}]
  %s2 = inlined_call_operand.hbm [shape: f32[16,128], index: 2, kind: output, shape index: {}]
  %s3 = sld [smem:[#allocation0]]
  $region18: #{tpu_custom_call.1} parent=0
    _
  %s5 = ssub.s32 1, %s3
  %s6 = scalar_select 0, %s5, %s3
  %7 = sst [smem:[#allocation3]] %s0
  $region1: #{tpu_custom_call.1} parent=0
    #allocation4 [shape = 'u8[8192]{0}', space=vmem, size = 0x2000, scoped, tag = 'input window, operand 1, single buffered']
    #allocation5 [shape = 's32[1]{0}', space=sflag, size = 0x4, scoped, tag = 'scoped memory for tpu_custom_call.1']
    #allocation6 [shape = 's32[1]{0}', space=sflag, size = 0x4, scoped, tag = 'scoped memory for tpu_custom_call.1']
    #allocation7 [shape = 'u8[8192]{0}', space=vmem, size = 0x2000, scoped, tag = 'output window, operand 0, single buffered']
    %8 = vsyncpa [#allocation5], 0
    %9 = vsyncpa [#allocation6], 0
    // Predicated region
    $region2: #{tpu_custom_call.1} parent=1 // pred_check
      _
    $region3: #{tpu_custom_call.1} parent=1 // pred_check_branch
      %11 = sbr.rel (0) target = $region5
    $region4: #{tpu_custom_call.1} parent=1 // pred_region
      %s13 = ssub.s32 256, 256
      %14 = vsyncadd [#allocation5], %s13
      %s15 = sshll.u32 [#allocation4], 4
      %s16 = int_to_ptr.vmem [resolvable:$true] %s15
      %21 = dma.hbm_to_vmem [thread:$0]  %s1, 256, %s16, [#allocation5], 128, 128, 8
    $region5: #{tpu_custom_call.1} parent=1 // pred_fallthru
      _
    // Predicated region
    $region6: #{tpu_custom_call.1} parent=1 // pred_check
      _
    $region7: #{tpu_custom_call.1} parent=1 // pred_check_branch
      %23 = sbr.rel (0) target = $region9
    $region8: #{tpu_custom_call.1} parent=1 // pred_region
      %24 = dma.done [#allocation5], 256
    $region9: #{tpu_custom_call.1} parent=1 // pred_fallthru
      _
    %s25 = sld [smem:[#allocation3]]
    %s26 = smul.u32 0, 16
    %v27 = vlaneseq
    %v28 = vshrl.u32 %v27, 7
    %v29 = vadd.s32 %v28, 8
    %v30 = vstv %s26
    %v31 = vadd.s32 %v28, %v30
    %v32 = vadd.s32 %v29, %v30
    %v33 = vlaneseq
    %v34 = vand.u32 %v33, 127
    %v35 = vmul.u32 %v31, 128
    %v36 = vmul.u32 %v32, 128
    %v37 = vadd.s32 %v35, %v34
    %v38 = vadd.s32 %v36, %v34
    %v39 = vmul.u32 %v37, 2654435761
    %v40 = vmul.u32 %v38, 2654435761
    %s41 = smul.u32 %s25, 2246822519
    %s42 = sadd.s32 %s41, 1
    %v43 = vstv %s42
    %v44 = vadd.s32 %v39, %v43
    %v45 = vadd.s32 %v40, %v43
    %v46 = vshrl.u32 %v44, 16
    %v47 = vshrl.u32 %v45, 16
    %v48 = vxor.u32 %v44, %v46
    %v49 = vxor.u32 %v45, %v47
    %v50 = vmul.u32 %v48, 2146121005
    %v51 = vmul.u32 %v49, 2146121005
    %v52 = vshrl.u32 %v50, 15
    %v53 = vshrl.u32 %v51, 15
    %v54 = vxor.u32 %v50, %v52
    %v55 = vxor.u32 %v51, %v53
    %v56 = vmul.u32 %v54, 2221713035
    %v57 = vmul.u32 %v55, 2221713035
    %v58 = vshrl.u32 %v56, 16
    %v59 = vshrl.u32 %v57, 16
    %v60 = vxor.u32 %v56, %v58
    %v61 = vxor.u32 %v57, %v59
    %vm62 = vcmp.lt.u32.totalorder %v60, 4080218931
    %vm63 = vcmp.lt.u32.totalorder %v61, 4080218931
    %v64 = vld [vmem:[#allocation4] sm:$0xff]
    %v65 = vld [vmem:[#allocation4 + $0x8] sm:$0xff]
    %v66 = vmul.f32 %v64, 0.9548445
    %v67 = vmul.f32 %v65, 0.9548445
    %v68 = vadd.f32 %v66, 0.08393557
    %v69 = vadd.f32 %v67, 0.08393557
    %v70 = vsel %vm62, %v68, -1.5947759
    %v71 = vsel %vm63, %v69, -1.5947759
    %72 = vst [vmem:[#allocation7] sm:$0xff] %v70
    %73 = vst [vmem:[#allocation7 + $0x8] sm:$0xff] %v71
    // Predicated region
    $region10: #{tpu_custom_call.1} parent=1 // pred_check
      _
    $region11: #{tpu_custom_call.1} parent=1 // pred_check_branch
      %75 = sbr.rel (0) target = $region13
    $region12: #{tpu_custom_call.1} parent=1 // pred_region
      %s77 = ssub.s32 256, 256
      %78 = vsyncadd [#allocation6], %s77
      %s79 = sshll.u32 [#allocation7], 4
      %s80 = int_to_ptr.vmem [resolvable:$true] %s79
      %85 = dma.vmem_to_hbm [thread:$0]  %s80, 256, %s2, [#allocation6], 128, 128, 8
    $region13: #{tpu_custom_call.1} parent=1 // pred_fallthru
      _
    // Predicated region
    $region14: #{tpu_custom_call.1} parent=1 // pred_check
      _
    $region15: #{tpu_custom_call.1} parent=1 // pred_check_branch
      %87 = sbr.rel (0) target = $region17
    $region16: #{tpu_custom_call.1} parent=1 // pred_region
      %88 = dma.done [#allocation6], 256
    $region17: #{tpu_custom_call.1} parent=1 // pred_fallthru
      _
    %89 = vsyncpa [#allocation5], 1
    %90 = vsyncpa [#allocation6], 1

</llo_original>
